<compile_context>
chip_gen: v5e
topology: v5e:2x2
jax: 0.10.0
libtpu: 0.0.40
codegen_flags: <defaults>
</compile_context>

<pallas_src>
import jax
import jax.numpy as jnp
from jax.experimental import pallas as pl
from jax.experimental.pallas import tpu as pltpu


def _round_up(n, m):
    return ((n + m - 1) // m) * m


# --------------------------------------------------------------------------- #
# Kernel
# --------------------------------------------------------------------------- #
def highway_kernel(x_ref, w_ref, b_ref, o_ref):
    dp = x_ref.shape[-1]                           # static (padded) feature dim
    x = x_ref[...]                                 # (tb, Dp), caller dtype
    # One fused MXU pass: [proj | gate] = x @ [Wp | Wg] + [bp | bg]
    acc = jnp.dot(x, w_ref[...], preferred_element_type=jnp.float32)
    acc = acc + b_ref[...]
    proj = jnp.maximum(acc[:, :dp], 0.0)           # relu branch   (VPU)
    gate = jax.nn.sigmoid(acc[:, dp:])             # sigmoid branch (EUP)
    xf = x.astype(jnp.float32)
    # gate*proj + (1-gate)*x  ==  x + gate*(proj - x)   (one fewer multiply)
    o_ref[...] = (xf + gate * (proj - xf)).astype(o_ref.dtype)


# --------------------------------------------------------------------------- #
# Parameter packing (hoist out of the hot path — weights never change per call)
# --------------------------------------------------------------------------- #
def pack_highway_params(w_proj, b_proj, w_gate, b_gate, *,
                        compute_dtype=jnp.float32):
    """Pack W = [Wp | Wg] -> (Dp, 2*Dp) and b = [bp | bg] -> (1, 2*Dp),
    feature dim zero-padded to a multiple of 128 (lane-dense)."""
    D = w_proj.shape[0]
    assert w_proj.shape == (D, D) and w_gate.shape == (D, D)
    assert b_proj.shape == (D,) and b_gate.shape == (D,)
    Dp = max(_round_up(D, 128), 128)
    w = jnp.zeros((Dp, 2 * Dp), dtype=compute_dtype)
    w = w.at[:D, :D].set(w_proj.astype(compute_dtype))
    w = w.at[:D, Dp:Dp + D].set(w_gate.astype(compute_dtype))
    b = jnp.zeros((1, 2 * Dp), dtype=jnp.float32)
    b = b.at[0, :D].set(b_proj.astype(jnp.float32))
    b = b.at[0, Dp:Dp + D].set(b_gate.astype(jnp.float32))
    return w, b


def _vmem_cap_bytes():
    """Generation-aware VMEM budget (physical capacity minus headroom)."""
    try:
        cap = int(pltpu.get_tpu_info().vmem_capacity_bytes)
    except Exception:
        cap = 64 << 20                       # conservative: v7x per-core VMEM
    return max(int(cap * 0.75), 16 << 20)


# --------------------------------------------------------------------------- #
# Wrapper
# --------------------------------------------------------------------------- #
def highway_packed(x, w_packed, b_packed, *, block_b=512):
    """Highway forward using pre-packed parameters (see pack_highway_params)."""
    B, D = x.shape
    Dp = w_packed.shape[0]
    assert w_packed.shape == (Dp, 2 * Dp) and b_packed.shape == (1, 2 * Dp)
    assert Dp % 128 == 0 and D <= Dp

    x_item = x.dtype.itemsize
    w_item = w_packed.dtype.itemsize
    sub = max(8, 32 // max(x_item, 1))       # sublane multiple for x's dtype

    # ---- batch-tile selection, VMEM-model driven --------------------------
    cap = _vmem_cap_bytes()
    w_bytes = Dp * 2 * Dp * w_item + 2 * Dp * 4     # resident W + b (1 buffer)

    def _footprint(tb_):
        io = 2 * (2 * tb_ * Dp * x_item)            # x + out tiles, double-buffered
        tmp = 2 * (tb_ * 2 * Dp * 4)                # f32 acc + proj/gate temporaries
        return io + tmp + w_bytes + (1 << 20)       # + margin

    tb = min(_round_up(max(block_b, 1), sub), _round_up(B, sub))
    while tb > sub and _footprint(tb) > cap:
        tb = max(sub, _round_up(tb // 2, sub))
    # Keep >= 2 grid steps when B allows (lets the parallel axis use both v7x TCs).
    if pl.cdiv(B, tb) < 2 and B > sub:
        tb = max(sub, _round_up(pl.cdiv(B, 2), sub))
    # TODO(synk): add an output-feature (N) grid axis once the resident packed
    # weight alone exceeds the VMEM cap (very large D); not needed at these sizes.

    need = _footprint(tb)
    vmem_limit = None if need <= (16 << 20) else int(min(need, cap))

    # ---- pad only when unavoidable (non-128 feature dim) -------------------
    if D == Dp:
        x_in, rows, padded = x, B, False            # zero-copy fast path
    else:
        rows = _round_up(B, tb)
        x_in = jnp.zeros((rows, Dp), dtype=x.dtype).at[:B, :D].set(x)
        padded = True

    grid = (pl.cdiv(rows, tb),)

    def _run(resident_mode):
        res_kw = {} if resident_mode is None else {"pipeline_mode": resident_mode}
        return pl.pallas_call(
            highway_kernel,
            out_shape=jax.ShapeDtypeStruct((rows, Dp), x.dtype),
            grid_spec=pltpu.PrefetchScalarGridSpec(
                num_scalar_prefetch=0,
                grid=grid,
                in_specs=[
                    pl.BlockSpec((tb, Dp), lambda i: (i, 0)),                 # x (streamed)
                    pl.BlockSpec((Dp, 2 * Dp), lambda i: (0, 0), **res_kw),   # W (resident)
                    pl.BlockSpec((1, 2 * Dp), lambda i: (0, 0), **res_kw),    # bias
                ],
                out_specs=pl.BlockSpec((tb, Dp), lambda i: (i, 0)),
            ),
            compiler_params=pltpu.CompilerParams(
                dimension_semantics=("parallel",),
                vmem_limit_bytes=vmem_limit,
            ),
        )(x_in, w_packed, b_packed)

    try:
        out = _run(pl.Buffered(1))    # single-buffer the resident weight/bias
    except Exception:
        out = _run(None)              # fallback: default double-buffering

    if padded:
        out = out[:B, :D]
    return out


def highway(x, w_proj, b_proj, w_gate, b_gate, *, block_b=512):
    """Convenience wrapper: packs parameters then runs the kernel.
    For repeated calls, pack once with pack_highway_params() and reuse."""
    w, b = pack_highway_params(w_proj, b_proj, w_gate, b_gate,
                               compute_dtype=x.dtype)
    return highway_packed(x, w, b, block_b=block_b)


# --------------------------------------------------------------------------- #
# Pure-JAX reference
# --------------------------------------------------------------------------- #
def highway_ref(x, w_proj, b_proj, w_gate, b_gate):
    xf = x.astype(jnp.float32)
    proj = jax.nn.relu(xf @ w_proj.astype(jnp.float32) + b_proj.astype(jnp.float32))
    gate = jax.nn.sigmoid(xf @ w_gate.astype(jnp.float32) + b_gate.astype(jnp.float32))
    return (gate * proj + (1.0 - gate) * xf).astype(x.dtype)


if __name__ == "__main__":
    def make_inputs(key, B, D, dtype=jnp.float32):
        kx, kwp, kbp, kwg = jax.random.split(key, 4)
        x = jax.random.normal(kx, (B, D), dtype=jnp.float32).astype(dtype)
        w_proj = (jax.random.normal(kwp, (D, D), dtype=jnp.float32) * (D ** -0.5)).astype(dtype)
        b_proj = (jax.random.normal(kbp, (D,), dtype=jnp.float32) * 0.1).astype(dtype)
        w_gate = (jax.random.normal(kwg, (D, D), dtype=jnp.float32) * (D ** -0.5)).astype(dtype)
        b_gate = jnp.full((D,), -2.0, dtype=dtype)   # nn.init.constant_(gate.bias, -2.0)
        return x, w_proj, b_proj, w_gate, b_gate

    # Case 1: canonical small shape (batch=8, input_size=32), convenience wrapper.
    args = make_inputs(jax.random.PRNGKey(0), 8, 32)
    out = jax.block_until_ready(highway(*args))
    ref = highway_ref(*args)
    assert out.shape == args[0].shape and out.dtype == args[0].dtype
    assert jnp.allclose(out, ref, atol=1e-5, rtol=1e-5), "mismatch (case 1)"

    # Case 2: ragged batch + non-128 feature dim + multi-step grid,
    # with packing hoisted out of the call path.
    x2, wp2, bp2, wg2, bg2 = make_inputs(jax.random.PRNGKey(1), 10, 40)
    w2, b2 = pack_highway_params(wp2, bp2, wg2, bg2, compute_dtype=x2.dtype)
    out2 = jax.block_until_ready(highway_packed(x2, w2, b2, block_b=8))
    ref2 = highway_ref(x2, wp2, bp2, wg2, bg2)
    assert out2.shape == x2.shape
    assert jnp.allclose(out2, ref2, atol=1e-5, rtol=1e-5), "mismatch (case 2)"

    # Case 3: lane-aligned D (=128) with ragged B (=20) -> zero-copy fast path,
    # cdiv grid with a masked partial tail block (2 grid steps).
    args3 = make_inputs(jax.random.PRNGKey(2), 20, 128)
    out3 = jax.block_until_ready(highway(*args3, block_b=16))
    ref3 = highway_ref(*args3)
    assert out3.shape == args3[0].shape
    assert jnp.allclose(out3, ref3, atol=1e-5, rtol=1e-5), "mismatch (case 3)"

    # Case 4: bf16 I/O path (inputs, params, and output stay bf16; f32 accumulate).
    args4 = make_inputs(jax.random.PRNGKey(3), 16, 64, dtype=jnp.bfloat16)
    out4 = jax.block_until_ready(highway(*args4))
    ref4 = highway_ref(*args4)
    assert out4.dtype == jnp.bfloat16 and out4.shape == args4[0].shape
    assert jnp.allclose(out4.astype(jnp.float32), ref4.astype(jnp.float32),
                        atol=3e-2, rtol=3e-2), "mismatch (case 4)"

    print("KERNEL_OK")
</pallas_src>

<mosaic_0001>
module attributes {stable_mosaic.version = 11 : i64} {
  func.func @highway_kernel(%arg0: i32, %arg1: memref<8x128xf32, #tpu.memory_space<vmem>>, %arg2: memref<128x256xf32, #tpu.memory_space<vmem>>, %arg3: memref<1x256xf32, #tpu.memory_space<vmem>>, %arg4: memref<8x128xf32, #tpu.memory_space<vmem>>) attributes {dimension_semantics = [#tpu.dimension_semantics<parallel>], iteration_bounds = array<i64: 1>, scalar_prefetch = 0 : i64, scratch_operands = 0 : i64, tpu.core_type = #tpu.core_type<tc>, window_params = [{transform_indices = @transform_0, window_bounds = array<i64: 8, 128>}, {pipeline_mode = #tpu.pipeline_mode<synchronous>, transform_indices = @transform_1, window_bounds = array<i64: 128, 256>}, {pipeline_mode = #tpu.pipeline_mode<synchronous>, transform_indices = @transform_2, window_bounds = array<i64: 1, 256>}, {transform_indices = @transform_3, window_bounds = array<i64: 8, 128>}]} {
    %c0 = arith.constant 0 : index
    %c0_0 = arith.constant 0 : index
    %0 = vector.load %arg1[%c0, %c0_0] : memref<8x128xf32, #tpu.memory_space<vmem>>, vector<8x128xf32>
    %c0_1 = arith.constant 0 : index
    %c0_2 = arith.constant 0 : index
    %1 = vector.load %arg2[%c0_1, %c0_2] : memref<128x256xf32, #tpu.memory_space<vmem>>, vector<128x256xf32>
    %cst = arith.constant dense<0.000000e+00> : vector<8x256xf32>
    %2 = tpu.matmul %0, %1, %cst {dimension_numbers = #tpu.dot_dimension_numbers<[1], [0], [0], [1], [0, 0, 1, 1], [], []>} : vector<8x128xf32>, vector<128x256xf32>, vector<8x256xf32> -> vector<8x256xf32>
    %c0_3 = arith.constant 0 : index
    %c0_4 = arith.constant 0 : index
    %3 = vector.load %arg3[%c0_3, %c0_4] : memref<1x256xf32, #tpu.memory_space<vmem>>, vector<1x256xf32>
    %4 = vector.broadcast %3 : vector<1x256xf32> to vector<8x256xf32>
    %5 = arith.addf %2, %4 : vector<8x256xf32>
    %6 = vector.extract_strided_slice %5 {offsets = [0, 0], sizes = [8, 128], strides = [1, 1]} : vector<8x256xf32> to vector<8x128xf32>
    %cst_5 = arith.constant 0.000000e+00 : f32
    %7 = vector.broadcast %cst_5 : f32 to vector<8x128xf32>
    %8 = arith.maximumf %6, %7 : vector<8x128xf32>
    %9 = vector.extract_strided_slice %5 {offsets = [0, 128], sizes = [8, 128], strides = [1, 1]} : vector<8x256xf32> to vector<8x128xf32>
    %10 = arith.negf %9 : vector<8x128xf32>
    %11 = math.exp %10 : vector<8x128xf32>
    %cst_6 = arith.constant 1.000000e+00 : f32
    %12 = vector.broadcast %cst_6 : f32 to vector<8x128xf32>
    %13 = arith.addf %12, %11 : vector<8x128xf32>
    %14 = arith.divf %12, %13 : vector<8x128xf32>
    %15 = arith.subf %8, %0 : vector<8x128xf32>
    %16 = arith.mulf %14, %15 : vector<8x128xf32>
    %17 = arith.addf %0, %16 : vector<8x128xf32>
    %c0_7 = arith.constant 0 : index
    %c0_8 = arith.constant 0 : index
    %18 = vector.load %arg4[%c0_7, %c0_8] : memref<8x128xf32, #tpu.memory_space<vmem>>, vector<8x128xf32>
    tpu.vector_store %arg4[%c0_7, %c0_8], %17 {strides = array<i32>} : memref<8x128xf32, #tpu.memory_space<vmem>>, vector<8x128xf32>,
    return
  }
  func.func @transform_0(%arg0: i32) -> (i32, i32) {
    %c0_i32 = arith.constant 0 : i32
    %c0_i32_0 = arith.constant 0 : i32
    return %arg0, %c0_i32 : i32, i32
  }
  func.func @transform_1(%arg0: i32) -> (i32, i32) {
    %c0_i32 = arith.constant 0 : i32
    %c0_i32_0 = arith.constant 0 : i32
    %c0_i32_1 = arith.constant 0 : i32
    return %c0_i32, %c0_i32_0 : i32, i32
  }
  func.func @transform_2(%arg0: i32) -> (i32, i32) {
    %c0_i32 = arith.constant 0 : i32
    %c0_i32_0 = arith.constant 0 : i32
    %c0_i32_1 = arith.constant 0 : i32
    return %c0_i32, %c0_i32_0 : i32, i32
  }
  func.func @transform_3(%arg0: i32) -> (i32, i32) {
    %c0_i32 = arith.constant 0 : i32
    %c0_i32_0 = arith.constant 0 : i32
    return %arg0, %c0_i32 : i32, i32
  }
}

module attributes {stable_mosaic.version = 11 : i64} {
  func.func @highway_kernel(%arg0: i32, %arg1: memref<8x128xf32, #tpu.memory_space<vmem>>, %arg2: memref<128x256xf32, #tpu.memory_space<vmem>>, %arg3: memref<1x256xf32, #tpu.memory_space<vmem>>, %arg4: memref<8x128xf32, #tpu.memory_space<vmem>>) attributes {dimension_semantics = [#tpu.dimension_semantics<parallel>], iteration_bounds = array<i64: 1>, scalar_prefetch = 0 : i64, scratch_operands = 0 : i64, tpu.core_type = #tpu.core_type<tc>, window_params = [{transform_indices = @transform_0, window_bounds = array<i64: 8, 128>}, {pipeline_mode = #tpu.pipeline_mode<synchronous>, transform_indices = @transform_1, window_bounds = array<i64: 128, 256>}, {pipeline_mode = #tpu.pipeline_mode<synchronous>, transform_indices = @transform_2, window_bounds = array<i64: 1, 256>}, {transform_indices = @transform_3, window_bounds = array<i64: 8, 128>}]} {
    %c0 = arith.constant 0 : index
    %c0_0 = arith.constant 0 : index
    %0 = vector.load %arg1[%c0, %c0_0] : memref<8x128xf32, #tpu.memory_space<vmem>>, vector<8x128xf32>
    %c0_1 = arith.constant 0 : index
    %c0_2 = arith.constant 0 : index
    %1 = vector.load %arg2[%c0_1, %c0_2] : memref<128x256xf32, #tpu.memory_space<vmem>>, vector<128x256xf32>
    %cst = arith.constant dense<0.000000e+00> : vector<8x256xf32>
    %2 = tpu.matmul %0, %1, %cst {dimension_numbers = #tpu.dot_dimension_numbers<[1], [0], [0], [1], [0, 0, 1, 1], [], []>} : vector<8x128xf32>, vector<128x256xf32>, vector<8x256xf32> -> vector<8x256xf32>
    %c0_3 = arith.constant 0 : index
    %c0_4 = arith.constant 0 : index
    %3 = vector.load %arg3[%c0_3, %c0_4] : memref<1x256xf32, #tpu.memory_space<vmem>>, vector<1x256xf32>
    %4 = vector.broadcast %3 : vector<1x256xf32> to vector<8x256xf32>
    %5 = arith.addf %2, %4 : vector<8x256xf32>
    %6 = vector.extract_strided_slice %5 {offsets = [0, 0], sizes = [8, 128], strides = [1, 1]} : vector<8x256xf32> to vector<8x128xf32>
    %cst_5 = arith.constant 0.000000e+00 : f32
    %7 = vector.broadcast %cst_5 : f32 to vector<8x128xf32>
    %8 = arith.maximumf %6, %7 : vector<8x128xf32>
    %9 = vector.extract_strided_slice %5 {offsets = [0, 128], sizes = [8, 128], strides = [1, 1]} : vector<8x256xf32> to vector<8x128xf32>
    %10 = arith.negf %9 : vector<8x128xf32>
    %11 = math.exp %10 : vector<8x128xf32>
    %cst_6 = arith.constant 1.000000e+00 : f32
    %12 = vector.broadcast %cst_6 : f32 to vector<8x128xf32>
    %13 = arith.addf %12, %11 : vector<8x128xf32>
    %14 = arith.divf %12, %13 : vector<8x128xf32>
    %15 = arith.subf %8, %0 : vector<8x128xf32>
    %16 = arith.mulf %14, %15 : vector<8x128xf32>
    %17 = arith.addf %0, %16 : vector<8x128xf32>
    %c0_7 = arith.constant 0 : index
    %c0_8 = arith.constant 0 : index
    %18 = vector.load %arg4[%c0_7, %c0_8] : memref<8x128xf32, #tpu.memory_space<vmem>>, vector<8x128xf32>
    tpu.vector_store %arg4[%c0_7, %c0_8], %17 {strides = array<i32>} : memref<8x128xf32, #tpu.memory_space<vmem>>, vector<8x128xf32>,
    return
  }
  func.func @transform_0(%arg0: i32) -> (i32, i32) {
    %c0_i32 = arith.constant 0 : i32
    %c0_i32_0 = arith.constant 0 : i32
    return %arg0, %c0_i32 : i32, i32
  }
  func.func @transform_1(%arg0: i32) -> (i32, i32) {
    %c0_i32 = arith.constant 0 : i32
    %c0_i32_0 = arith.constant 0 : i32
    %c0_i32_1 = arith.constant 0 : i32
    return %c0_i32, %c0_i32_0 : i32, i32
  }
  func.func @transform_2(%arg0: i32) -> (i32, i32) {
    %c0_i32 = arith.constant 0 : i32
    %c0_i32_0 = arith.constant 0 : i32
    %c0_i32_1 = arith.constant 0 : i32
    return %c0_i32, %c0_i32_0 : i32, i32
  }
  func.func @transform_3(%arg0: i32) -> (i32, i32) {
    %c0_i32 = arith.constant 0 : i32
    %c0_i32_0 = arith.constant 0 : i32
    return %arg0, %c0_i32 : i32, i32
  }
}

</mosaic_0001>

<llo_original>
// kernel: tpu_custom_call.1
$region0: #{tpu_custom_call.1}
  #allocation0 [shape = 'u32[]', space=smem, size = 0x4, offset = 0x4, fixed_abs, tag = 'smem constant byte address 0x4 - core index']
  #allocation1 [shape = 'u32[72,128]{1,0:T(1,128)}', space=vmem, size = 0x9000, scoped, tag = 'internal scratch']
  %s0 = inlined_call_operand.hbm [shape: f32[8,128], index: 0, kind: input, shape index: {}]
  %s1 = inlined_call_operand.hbm [shape: f32[128,256], index: 1, kind: input, shape index: {}]
  %s2 = inlined_call_operand.hbm [shape: f32[1,256], index: 2, kind: input, shape index: {}]
  %s3 = inlined_call_operand.hbm [shape: f32[8,128], index: 3, kind: output, shape index: {}]
  %s4 = sld [smem:[#allocation0]]
  $region34: #{tpu_custom_call.1} parent=0
    _
  %s6 = ssub.s32 1, %s4
  %s7 = scalar_select 0, %s6, %s4
  $region1: #{tpu_custom_call.1} parent=0
    #allocation2 [shape = 'u8[4096]{0}', space=vmem, size = 0x1000, scoped, tag = 'input window, operand 0, single buffered']
    #allocation3 [shape = 's32[1]{0}', space=sflag, size = 0x4, scoped, tag = 'scoped memory for tpu_custom_call.1']
    #allocation4 [shape = 's32[1]{0}', space=sflag, size = 0x4, scoped, tag = 'scoped memory for tpu_custom_call.1']
    #allocation5 [shape = 'u8[131072]{0}', space=vmem, size = 0x20000, scoped, tag = 'input window, operand 1, single buffered']
    #allocation6 [shape = 's32[1]{0}', space=sflag, size = 0x4, scoped, tag = 'scoped memory for tpu_custom_call.1']
    #allocation7 [shape = 'u8[1024]{0}', space=vmem, size = 0x400, scoped, tag = 'input window, operand 2, single buffered']
    #allocation8 [shape = 'u8[4096]{0}', space=vmem, size = 0x1000, scoped, tag = 'output window, operand 0, single buffered']
    %8 = vsyncpa [#allocation3], 0
    %9 = vsyncpa [#allocation6], 0
    %10 = vsyncpa [#allocation4], 0
    // Predicated region
    $region2: #{tpu_custom_call.1} parent=1 // pred_check
      _
    $region3: #{tpu_custom_call.1} parent=1 // pred_check_branch
      %12 = sbr.rel (0) target = $region5
    $region4: #{tpu_custom_call.1} parent=1 // pred_region
      %14 = vsyncadd [#allocation3], 0
      %s16 = sshll.u32 %s0, 4
      %s17 = int_to_ptr.hbm [resolvable:$true] %s16
      %s18 = sshll.u32 [#allocation2], 4
      %s19 = int_to_ptr.vmem [resolvable:$true] %s18
      %21 = dma.hbm_to_vmem [thread:$0]  %s17, 128, %s19, [#allocation3]
    $region5: #{tpu_custom_call.1} parent=1 // pred_fallthru
      _
    // Predicated region
    $region6: #{tpu_custom_call.1} parent=1 // pred_check
      _
    $region7: #{tpu_custom_call.1} parent=1 // pred_check_branch
      %23 = sbr.rel (0) target = $region9
    $region8: #{tpu_custom_call.1} parent=1 // pred_region
      %25 = vsyncadd [#allocation6], 0
      %s26 = sshll.u32 %s1, 4
      %s27 = int_to_ptr.hbm [resolvable:$true] %s26
      %s28 = sshll.u32 [#allocation5], 4
      %s29 = int_to_ptr.vmem [resolvable:$true] %s28
      %34 = dma.hbm_to_vmem [thread:$0]  %s27, 4096, %s29, [#allocation6], 256, 256, 16
    $region9: #{tpu_custom_call.1} parent=1 // pred_fallthru
      _
    // Predicated region
    $region10: #{tpu_custom_call.1} parent=1 // pred_check
      _
    $region11: #{tpu_custom_call.1} parent=1 // pred_check_branch
      %36 = sbr.rel (0) target = $region13
    $region12: #{tpu_custom_call.1} parent=1 // pred_region
      %38 = vsyncadd [#allocation6], 0
      %s40 = sshll.u32 %s2, 4
      %s41 = int_to_ptr.hbm [resolvable:$true] %s40
      %s42 = sshll.u32 [#allocation7], 4
      %s43 = int_to_ptr.vmem [resolvable:$true] %s42
      %45 = dma.hbm_to_vmem [thread:$0]  %s41, 32, %s43, [#allocation6]
    $region13: #{tpu_custom_call.1} parent=1 // pred_fallthru
      _
    // Predicated region
    $region14: #{tpu_custom_call.1} parent=1 // pred_check
      _
    $region15: #{tpu_custom_call.1} parent=1 // pred_check_branch
      %47 = sbr.rel (0) target = $region17
    $region16: #{tpu_custom_call.1} parent=1 // pred_region
      %49 = dma.done [#allocation3], 128
    $region17: #{tpu_custom_call.1} parent=1 // pred_fallthru
      _
    // Predicated region
    $region18: #{tpu_custom_call.1} parent=1 // pred_check
      _
    $region19: #{tpu_custom_call.1} parent=1 // pred_check_branch
      %51 = sbr.rel (0) target = $region21
    $region20: #{tpu_custom_call.1} parent=1 // pred_region
      %53 = dma.done [#allocation6], 4096
    $region21: #{tpu_custom_call.1} parent=1 // pred_fallthru
      _
    // Predicated region
    $region22: #{tpu_custom_call.1} parent=1 // pred_check
      _
    $region23: #{tpu_custom_call.1} parent=1 // pred_check_branch
      %55 = sbr.rel (0) target = $region25
    $region24: #{tpu_custom_call.1} parent=1 // pred_region
      %57 = dma.done [#allocation6], 32
    $region25: #{tpu_custom_call.1} parent=1 // pred_fallthru
      _
    %v58 = vld [vmem:[#allocation2] sm:$0xff]
    %v59 = vld [vmem:[#allocation5] sm:$0xff]
    %v60 = vld [vmem:[#allocation5 + $0x8] sm:$0xff]
    %v61 = vld [vmem:[#allocation5 + $0x10] sm:$0xff]
    %v62 = vld [vmem:[#allocation5 + $0x18] sm:$0xff]
    %v63 = vld [vmem:[#allocation5 + $0x20] sm:$0xff]
    %v64 = vld [vmem:[#allocation5 + $0x28] sm:$0xff]
    %v65 = vld [vmem:[#allocation5 + $0x30] sm:$0xff]
    %v66 = vld [vmem:[#allocation5 + $0x38] sm:$0xff]
    %v67 = vld [vmem:[#allocation5 + $0x40] sm:$0xff]
    %v68 = vld [vmem:[#allocation5 + $0x48] sm:$0xff]
    %v69 = vld [vmem:[#allocation5 + $0x50] sm:$0xff]
    %v70 = vld [vmem:[#allocation5 + $0x58] sm:$0xff]
    %v71 = vld [vmem:[#allocation5 + $0x60] sm:$0xff]
    %v72 = vld [vmem:[#allocation5 + $0x68] sm:$0xff]
    %v73 = vld [vmem:[#allocation5 + $0x70] sm:$0xff]
    %v74 = vld [vmem:[#allocation5 + $0x78] sm:$0xff]
    %v75 = vld [vmem:[#allocation5 + $0x80] sm:$0xff]
    %v76 = vld [vmem:[#allocation5 + $0x88] sm:$0xff]
    %v77 = vld [vmem:[#allocation5 + $0x90] sm:$0xff]
    %v78 = vld [vmem:[#allocation5 + $0x98] sm:$0xff]
    %v79 = vld [vmem:[#allocation5 + $0xa0] sm:$0xff]
    %v80 = vld [vmem:[#allocation5 + $0xa8] sm:$0xff]
    %v81 = vld [vmem:[#allocation5 + $0xb0] sm:$0xff]
    %v82 = vld [vmem:[#allocation5 + $0xb8] sm:$0xff]
    %v83 = vld [vmem:[#allocation5 + $0xc0] sm:$0xff]
    %v84 = vld [vmem:[#allocation5 + $0xc8] sm:$0xff]
    %v85 = vld [vmem:[#allocation5 + $0xd0] sm:$0xff]
    %v86 = vld [vmem:[#allocation5 + $0xd8] sm:$0xff]
    %v87 = vld [vmem:[#allocation5 + $0xe0] sm:$0xff]
    %v88 = vld [vmem:[#allocation5 + $0xe8] sm:$0xff]
    %v89 = vld [vmem:[#allocation5 + $0xf0] sm:$0xff]
    %v90 = vld [vmem:[#allocation5 + $0xf8] sm:$0xff]
    %v91 = vld [vmem:[#allocation7] sm:$0x3]
    %v93 = vperm.slane %v91, 0
    %v94 = vperm.slane %v91, 1
    %97 = vmatpush.msra.mxu0 %v89
    %98 = vmatpush.msra.mxu0 %v87
    %99 = vmatpush.msra.mxu0 %v85
    %100 = vmatpush.msra.mxu0 %v83
    %101 = vmatpush.msra.mxu0 %v81
    %102 = vmatpush.msra.mxu0 %v79
    %103 = vmatpush.msra.mxu0 %v77
    %104 = vmatpush.msra.mxu0 %v75
    %105 = vmatpush.msra.mxu0 %v73
    %106 = vmatpush.msra.mxu0 %v71
    %107 = vmatpush.msra.mxu0 %v69
    %108 = vmatpush.msra.mxu0 %v67
    %109 = vmatpush.msra.mxu0 %v65
    %110 = vmatpush.msra.mxu0 %v63
    %111 = vmatpush.msra.mxu0 %v61
    %112 = vmatpush.msra.mxu0 %v59
    %113 = vmatmul.f32.gmra.mxu0 %v58
    %v114 = vpop.f32.mrf.mxu0
    %v115 = vadd.f32 %v93, %v114
    %116 = vdwg.mxu0
    %117 = vmatpush.msra.mxu0 %v90
    %118 = vmatpush.msra.mxu0 %v88
    %119 = vmatpush.msra.mxu0 %v86
    %120 = vmatpush.msra.mxu0 %v84
    %121 = vmatpush.msra.mxu0 %v82
    %122 = vmatpush.msra.mxu0 %v80
    %123 = vmatpush.msra.mxu0 %v78
    %124 = vmatpush.msra.mxu0 %v76
    %125 = vmatpush.msra.mxu0 %v74
    %126 = vmatpush.msra.mxu0 %v72
    %127 = vmatpush.msra.mxu0 %v70
    %128 = vmatpush.msra.mxu0 %v68
    %129 = vmatpush.msra.mxu0 %v66
    %130 = vmatpush.msra.mxu0 %v64
    %131 = vmatpush.msra.mxu0 %v62
    %132 = vmatpush.msra.mxu0 %v60
    %133 = vmatmul.f32.gmra.mxu0 %v58
    %v134 = vpop.f32.mrf.mxu0
    %v135 = vadd.f32 %v94, %v134
    %136 = vdwg.mxu0
    %v137 = vmax.f32 %v115, 0.0
    %v138 = vxor.u32 %v135, 2147483648
    %v139 = vmul.f32 %v138, 1.442695
    %v140 = vpow.pop %v139
    %v141 = vadd.f32 %v140, 1.0
    %v142 = vrcp.pop %v141
    %v143 = vmul.f32 %v141, %v142
    %v144 = vsub.f32 1.0, %v143
    %v145 = vmul.f32 %v142, %v144
    %v146 = vadd.f32 %v142, %v145
    %vm147 = vweird.f32 %v141
    %vm148 = vweird.f32 %v142
    %vm149 = vmor %vm147, %vm148
    %v150 = vsel %vm149, %v142, %v146
    %v151 = vand.u32 2147483647, %v141
    %vm152 = vcmp.eq.f32.partialorder %v151, 8.507059e+37
    %v153 = vand.u32 %v141, 2147483648
    %v154 = vor.u32 1.1754944e-38, %v153
    %v155 = vsel %vm152, %v154, %v150
    %v156 = vmul.f32 1.0, %v155
    %v157 = vsub.f32 %v137, %v58
    %v158 = vmul.f32 %v156, %v157
    %v159 = vadd.f32 %v58, %v158
    %160 = vst [vmem:[#allocation8] sm:$0xff] %v159
    // Predicated region
    $region26: #{tpu_custom_call.1} parent=1 // pred_check
      _
    $region27: #{tpu_custom_call.1} parent=1 // pred_check_branch
      %162 = sbr.rel (0) target = $region29
    $region28: #{tpu_custom_call.1} parent=1 // pred_region
      %164 = vsyncadd [#allocation4], 0
      %s166 = sshll.u32 [#allocation8], 4
      %s167 = int_to_ptr.vmem [resolvable:$true] %s166
      %s168 = sshll.u32 %s3, 4
      %s169 = int_to_ptr.hbm [resolvable:$true] %s168
      %171 = dma.vmem_to_hbm [thread:$0]  %s167, 128, %s169, [#allocation4]
    $region29: #{tpu_custom_call.1} parent=1 // pred_fallthru
      _
    // Predicated region
    $region30: #{tpu_custom_call.1} parent=1 // pred_check
      _
    $region31: #{tpu_custom_call.1} parent=1 // pred_check_branch
      %173 = sbr.rel (0) target = $region33
    $region32: #{tpu_custom_call.1} parent=1 // pred_region
      %175 = dma.done [#allocation4], 128
    $region33: #{tpu_custom_call.1} parent=1 // pred_fallthru
      _
    %176 = vsyncpa [#allocation3], 1
    %177 = vsyncpa [#allocation6], 1
    %178 = vsyncpa [#allocation4], 1

// kernel: tpu_custom_call.1
$region0: #{tpu_custom_call.1}
  #allocation0 [shape = 'u32[]', space=smem, size = 0x4, offset = 0x4, fixed_abs, tag = 'smem constant byte address 0x4 - core index']
  #allocation1 [shape = 'u32[72,128]{1,0:T(1,128)}', space=vmem, size = 0x9000, scoped, tag = 'internal scratch']
  %s0 = inlined_call_operand.hbm [shape: f32[8,128], index: 0, kind: input, shape index: {}]
  %s1 = inlined_call_operand.hbm [shape: f32[128,256], index: 1, kind: input, shape index: {}]
  %s2 = inlined_call_operand.hbm [shape: f32[1,256], index: 2, kind: input, shape index: {}]
  %s3 = inlined_call_operand.hbm [shape: f32[8,128], index: 3, kind: output, shape index: {}]
  %s4 = sld [smem:[#allocation0]]
  $region34: #{tpu_custom_call.1} parent=0
    _
  %s6 = ssub.s32 1, %s4
  %s7 = scalar_select 0, %s6, %s4
  $region1: #{tpu_custom_call.1} parent=0
    #allocation2 [shape = 'u8[4096]{0}', space=vmem, size = 0x1000, scoped, tag = 'input window, operand 0, single buffered']
    #allocation3 [shape = 's32[1]{0}', space=sflag, size = 0x4, scoped, tag = 'scoped memory for tpu_custom_call.1']
    #allocation4 [shape = 's32[1]{0}', space=sflag, size = 0x4, scoped, tag = 'scoped memory for tpu_custom_call.1']
    #allocation5 [shape = 'u8[131072]{0}', space=vmem, size = 0x20000, scoped, tag = 'input window, operand 1, single buffered']
    #allocation6 [shape = 's32[1]{0}', space=sflag, size = 0x4, scoped, tag = 'scoped memory for tpu_custom_call.1']
    #allocation7 [shape = 'u8[1024]{0}', space=vmem, size = 0x400, scoped, tag = 'input window, operand 2, single buffered']
    #allocation8 [shape = 'u8[4096]{0}', space=vmem, size = 0x1000, scoped, tag = 'output window, operand 0, single buffered']
    %8 = vsyncpa [#allocation3], 0
    %9 = vsyncpa [#allocation6], 0
    %10 = vsyncpa [#allocation4], 0
    // Predicated region
    $region2: #{tpu_custom_call.1} parent=1 // pred_check
      _
    $region3: #{tpu_custom_call.1} parent=1 // pred_check_branch
      %12 = sbr.rel (0) target = $region5
    $region4: #{tpu_custom_call.1} parent=1 // pred_region
      %14 = vsyncadd [#allocation3], 0
      %s16 = sshll.u32 %s0, 4
      %s17 = int_to_ptr.hbm [resolvable:$true] %s16
      %s18 = sshll.u32 [#allocation2], 4
      %s19 = int_to_ptr.vmem [resolvable:$true] %s18
      %21 = dma.hbm_to_vmem [thread:$0]  %s17, 128, %s19, [#allocation3]
    $region5: #{tpu_custom_call.1} parent=1 // pred_fallthru
      _
    // Predicated region
    $region6: #{tpu_custom_call.1} parent=1 // pred_check
      _
    $region7: #{tpu_custom_call.1} parent=1 // pred_check_branch
      %23 = sbr.rel (0) target = $region9
    $region8: #{tpu_custom_call.1} parent=1 // pred_region
      %25 = vsyncadd [#allocation6], 0
      %s26 = sshll.u32 %s1, 4
      %s27 = int_to_ptr.hbm [resolvable:$true] %s26
      %s28 = sshll.u32 [#allocation5], 4
      %s29 = int_to_ptr.vmem [resolvable:$true] %s28
      %34 = dma.hbm_to_vmem [thread:$0]  %s27, 4096, %s29, [#allocation6], 256, 256, 16
    $region9: #{tpu_custom_call.1} parent=1 // pred_fallthru
      _
    // Predicated region
    $region10: #{tpu_custom_call.1} parent=1 // pred_check
      _
    $region11: #{tpu_custom_call.1} parent=1 // pred_check_branch
      %36 = sbr.rel (0) target = $region13
    $region12: #{tpu_custom_call.1} parent=1 // pred_region
      %38 = vsyncadd [#allocation6], 0
      %s40 = sshll.u32 %s2, 4
      %s41 = int_to_ptr.hbm [resolvable:$true] %s40
      %s42 = sshll.u32 [#allocation7], 4
      %s43 = int_to_ptr.vmem [resolvable:$true] %s42
      %45 = dma.hbm_to_vmem [thread:$0]  %s41, 32, %s43, [#allocation6]
    $region13: #{tpu_custom_call.1} parent=1 // pred_fallthru
      _
    // Predicated region
    $region14: #{tpu_custom_call.1} parent=1 // pred_check
      _
    $region15: #{tpu_custom_call.1} parent=1 // pred_check_branch
      %47 = sbr.rel (0) target = $region17
    $region16: #{tpu_custom_call.1} parent=1 // pred_region
      %49 = dma.done [#allocation3], 128
    $region17: #{tpu_custom_call.1} parent=1 // pred_fallthru
      _
    // Predicated region
    $region18: #{tpu_custom_call.1} parent=1 // pred_check
      _
    $region19: #{tpu_custom_call.1} parent=1 // pred_check_branch
      %51 = sbr.rel (0) target = $region21
    $region20: #{tpu_custom_call.1} parent=1 // pred_region
      %53 = dma.done [#allocation6], 4096
    $region21: #{tpu_custom_call.1} parent=1 // pred_fallthru
      _
    // Predicated region
    $region22: #{tpu_custom_call.1} parent=1 // pred_check
      _
    $region23: #{tpu_custom_call.1} parent=1 // pred_check_branch
      %55 = sbr.rel (0) target = $region25
    $region24: #{tpu_custom_call.1} parent=1 // pred_region
      %57 = dma.done [#allocation6], 32
    $region25: #{tpu_custom_call.1} parent=1 // pred_fallthru
      _
    %v58 = vld [vmem:[#allocation2] sm:$0xff]
    %v59 = vld [vmem:[#allocation5] sm:$0xff]
    %v60 = vld [vmem:[#allocation5 + $0x8] sm:$0xff]
    %v61 = vld [vmem:[#allocation5 + $0x10] sm:$0xff]
    %v62 = vld [vmem:[#allocation5 + $0x18] sm:$0xff]
    %v63 = vld [vmem:[#allocation5 + $0x20] sm:$0xff]
    %v64 = vld [vmem:[#allocation5 + $0x28] sm:$0xff]
    %v65 = vld [vmem:[#allocation5 + $0x30] sm:$0xff]
    %v66 = vld [vmem:[#allocation5 + $0x38] sm:$0xff]
    %v67 = vld [vmem:[#allocation5 + $0x40] sm:$0xff]
    %v68 = vld [vmem:[#allocation5 + $0x48] sm:$0xff]
    %v69 = vld [vmem:[#allocation5 + $0x50] sm:$0xff]
    %v70 = vld [vmem:[#allocation5 + $0x58] sm:$0xff]
    %v71 = vld [vmem:[#allocation5 + $0x60] sm:$0xff]
    %v72 = vld [vmem:[#allocation5 + $0x68] sm:$0xff]
    %v73 = vld [vmem:[#allocation5 + $0x70] sm:$0xff]
    %v74 = vld [vmem:[#allocation5 + $0x78] sm:$0xff]
    %v75 = vld [vmem:[#allocation5 + $0x80] sm:$0xff]
    %v76 = vld [vmem:[#allocation5 + $0x88] sm:$0xff]
    %v77 = vld [vmem:[#allocation5 + $0x90] sm:$0xff]
    %v78 = vld [vmem:[#allocation5 + $0x98] sm:$0xff]
    %v79 = vld [vmem:[#allocation5 + $0xa0] sm:$0xff]
    %v80 = vld [vmem:[#allocation5 + $0xa8] sm:$0xff]
    %v81 = vld [vmem:[#allocation5 + $0xb0] sm:$0xff]
    %v82 = vld [vmem:[#allocation5 + $0xb8] sm:$0xff]
    %v83 = vld [vmem:[#allocation5 + $0xc0] sm:$0xff]
    %v84 = vld [vmem:[#allocation5 + $0xc8] sm:$0xff]
    %v85 = vld [vmem:[#allocation5 + $0xd0] sm:$0xff]
    %v86 = vld [vmem:[#allocation5 + $0xd8] sm:$0xff]
    %v87 = vld [vmem:[#allocation5 + $0xe0] sm:$0xff]
    %v88 = vld [vmem:[#allocation5 + $0xe8] sm:$0xff]
    %v89 = vld [vmem:[#allocation5 + $0xf0] sm:$0xff]
    %v90 = vld [vmem:[#allocation5 + $0xf8] sm:$0xff]
    %v91 = vld [vmem:[#allocation7] sm:$0x3]
    %v93 = vperm.slane %v91, 0
    %v94 = vperm.slane %v91, 1
    %97 = vmatpush.msra.mxu0 %v89
    %98 = vmatpush.msra.mxu0 %v87
    %99 = vmatpush.msra.mxu0 %v85
    %100 = vmatpush.msra.mxu0 %v83
    %101 = vmatpush.msra.mxu0 %v81
    %102 = vmatpush.msra.mxu0 %v79
    %103 = vmatpush.msra.mxu0 %v77
    %104 = vmatpush.msra.mxu0 %v75
    %105 = vmatpush.msra.mxu0 %v73
    %106 = vmatpush.msra.mxu0 %v71
    %107 = vmatpush.msra.mxu0 %v69
    %108 = vmatpush.msra.mxu0 %v67
    %109 = vmatpush.msra.mxu0 %v65
    %110 = vmatpush.msra.mxu0 %v63
    %111 = vmatpush.msra.mxu0 %v61
    %112 = vmatpush.msra.mxu0 %v59
    %113 = vmatmul.f32.gmra.mxu0 %v58
    %v114 = vpop.f32.mrf.mxu0
    %v115 = vadd.f32 %v93, %v114
    %116 = vdwg.mxu0
    %117 = vmatpush.msra.mxu0 %v90
    %118 = vmatpush.msra.mxu0 %v88
    %119 = vmatpush.msra.mxu0 %v86
    %120 = vmatpush.msra.mxu0 %v84
    %121 = vmatpush.msra.mxu0 %v82
    %122 = vmatpush.msra.mxu0 %v80
    %123 = vmatpush.msra.mxu0 %v78
    %124 = vmatpush.msra.mxu0 %v76
    %125 = vmatpush.msra.mxu0 %v74
    %126 = vmatpush.msra.mxu0 %v72
    %127 = vmatpush.msra.mxu0 %v70
    %128 = vmatpush.msra.mxu0 %v68
    %129 = vmatpush.msra.mxu0 %v66
    %130 = vmatpush.msra.mxu0 %v64
    %131 = vmatpush.msra.mxu0 %v62
    %132 = vmatpush.msra.mxu0 %v60
    %133 = vmatmul.f32.gmra.mxu0 %v58
    %v134 = vpop.f32.mrf.mxu0
    %v135 = vadd.f32 %v94, %v134
    %136 = vdwg.mxu0
    %v137 = vmax.f32 %v115, 0.0
    %v138 = vxor.u32 %v135, 2147483648
    %v139 = vmul.f32 %v138, 1.442695
    %v140 = vpow.pop %v139
    %v141 = vadd.f32 %v140, 1.0
    %v142 = vrcp.pop %v141
    %v143 = vmul.f32 %v141, %v142
    %v144 = vsub.f32 1.0, %v143
    %v145 = vmul.f32 %v142, %v144
    %v146 = vadd.f32 %v142, %v145
    %vm147 = vweird.f32 %v141
    %vm148 = vweird.f32 %v142
    %vm149 = vmor %vm147, %vm148
    %v150 = vsel %vm149, %v142, %v146
    %v151 = vand.u32 2147483647, %v141
    %vm152 = vcmp.eq.f32.partialorder %v151, 8.507059e+37
    %v153 = vand.u32 %v141, 2147483648
    %v154 = vor.u32 1.1754944e-38, %v153
    %v155 = vsel %vm152, %v154, %v150
    %v156 = vmul.f32 1.0, %v155
    %v157 = vsub.f32 %v137, %v58
    %v158 = vmul.f32 %v156, %v157
    %v159 = vadd.f32 %v58, %v158
    %160 = vst [vmem:[#allocation8] sm:$0xff] %v159
    // Predicated region
    $region26: #{tpu_custom_call.1} parent=1 // pred_check
      _
    $region27: #{tpu_custom_call.1} parent=1 // pred_check_branch
      %162 = sbr.rel (0) target = $region29
    $region28: #{tpu_custom_call.1} parent=1 // pred_region
      %164 = vsyncadd [#allocation4], 0
      %s166 = sshll.u32 [#allocation8], 4
      %s167 = int_to_ptr.vmem [resolvable:$true] %s166
      %s168 = sshll.u32 %s3, 4
      %s169 = int_to_ptr.hbm [resolvable:$true] %s168
      %171 = dma.vmem_to_hbm [thread:$0]  %s167, 128, %s169, [#allocation4]
    $region29: #{tpu_custom_call.1} parent=1 // pred_fallthru
      _
    // Predicated region
    $region30: #{tpu_custom_call.1} parent=1 // pred_check
      _
    $region31: #{tpu_custom_call.1} parent=1 // pred_check_branch
      %173 = sbr.rel (0) target = $region33
    $region32: #{tpu_custom_call.1} parent=1 // pred_region
      %175 = dma.done [#allocation4], 128
    $region33: #{tpu_custom_call.1} parent=1 // pred_fallthru
      _
    %176 = vsyncpa [#allocation3], 1
    %177 = vsyncpa [#allocation6], 1
    %178 = vsyncpa [#allocation4], 1

</llo_original>
